<compile_context>
chip_gen: v6e
topology: v6e:2x2x1
jax: 0.10.0
libtpu: 0.0.40
codegen_flags: <defaults>
</compile_context>

<pallas_src>
import functools

import jax
import jax.numpy as jnp
from jax.experimental import pallas as pl
from jax.experimental.pallas import tpu as pltpu

_LANE = 128
_CUMSUM_BLK = 256          # lane width of level-1 cumsum matmul (fills 256x256 MXU on v6e/v7x)
_ROWS_PER_TILE = 512       # sorted-axis rows per grid step (tile = 512*256 = 128K elements)


def _margin_kernel(inp_ref, tgt_ref, mask_ref, err_ref):
    # one-hot scatter along channel dim + max-margin errors (elementwise)
    ch = jax.lax.broadcasted_iota(jnp.int32, inp_ref.shape, 1)     # (1, C, T)
    onehot = (tgt_ref[...] == ch).astype(jnp.float32)              # (1,1,T) bcast -> (1,C,T)
    mask_ref[...] = onehot.astype(mask_ref.dtype)                  # int8, exact for 0/1
    err_ref[...] = 1.0 - (onehot * 2.0 - 1.0) * inp_ref[...]       # f32 compute (v5e-safe)


def _lovasz_kernel(err_ref, lab_ref, tri_ref, strict_ref, out_ref,
                   carry_ref, loss_ref, *, total):
    t = pl.program_id(1)
    nt = pl.num_programs(1)
    TR, B = err_ref.shape[1], err_ref.shape[2]

    @pl.when(t == 0)
    def _():                                   # new sample: reset carry + loss accumulator
        carry_ref[...] = jnp.zeros_like(carry_ref)
        loss_ref[...] = jnp.zeros_like(loss_ref)

    err = err_ref[0]                           # (TR, B) f32, sorted descending (flat row-major)
    lab = lab_ref[0].astype(jnp.float32)       # (TR, B) in {0, 1}
    lab_bf = lab.astype(jnp.bfloat16)

    # --- hierarchical inclusive cumsum of labels along the flattened order ---
    # level 1: per-row cumsum, one (TR,B)x(B,B) bf16 MXU matmul (f32 accumulate)
    intra = jnp.dot(lab_bf, tri_ref[...], preferred_element_type=jnp.float32)   # (TR, B)
    # level 2: exclusive prefix over the per-row sums (= last lane of intra)
    rowsum = intra[:, B - 1:B]                                                  # (TR, 1), ints <= B
    rowsum_b = jnp.broadcast_to(rowsum, (TR, _LANE)).astype(jnp.bfloat16)       # exact ints <= 256
    row_carry = jnp.dot(strict_ref[...], rowsum_b,
                        preferred_element_type=jnp.float32)[:, 0:1]             # (TR, 1)
    # level 3: scalar carry from previous tiles of the same sample
    csum = intra + row_carry + carry_ref[...]                                   # inclusive cumsum

    # flat position p of each element in the sorted order
    ri = jax.lax.broadcasted_iota(jnp.int32, (TR, B), 0)
    ci = jax.lax.broadcasted_iota(jnp.int32, (TR, B), 1)
    pos = ((t * TR + ri) * B + ci).astype(jnp.float32)
    # TODO(synk): pos/csum lose integer exactness past ~2^24 elements per sample.

    # Lovasz gradient iou(p) - iou(p-1) fused into a single quotient:
    #   A = total - csum, Bv = total + p - csum, u1 = Bv + 1 (= union)
    #   grad = (A + lab*(u1 - A)) / ((Bv + lab) * u1)      (p = 0 gives iou(0))
    a = total - csum
    bv = total + pos - csum
    u1 = bv + 1.0
    grad = (a + lab * (u1 - a)) / ((bv + lab) * u1)

    loss_ref[...] += jnp.sum(jnp.maximum(err, 0.0) * grad, keepdims=True)
    carry_ref[...] += jnp.sum(rowsum, keepdims=True)

    @pl.when(t == nt - 1)
    def _():
        out_ref[...] = jnp.broadcast_to(loss_ref[...], out_ref.shape).astype(out_ref.dtype)


def _margin_tile(hw, c):
    # HBM-bound kernel: biggest lane tile that keeps one buffer set <= ~4 MiB,
    # capped at 16K lanes; ragged edges handled by the cdiv grid (boundary DMAs
    # are clamped), so no divisibility fallback is needed.
    budget = 4 << 20
    t = budget // (9 * c + 4)
    t = max(_LANE, (t // _LANE) * _LANE)
    t = min(t, 16384)
    return hw if hw <= t else t


def lovasz_loss_2d(inputs, targets):
    N, C, H, W = inputs.shape
    HW = H * W
    P = C * HW

    inp3 = inputs.reshape(N, C, HW).astype(jnp.float32)
    tgt3 = targets.reshape(N, 1, HW).astype(jnp.int32)

    # ---- kernel 1: one-hot mask (int8) + max-margin errors (f32), tiled over (N, HW) ----
    TILE = _margin_tile(HW, C)
    blk1 = TILE * (9 * C + 4)
    mask3, err3 = pl.pallas_call(
        _margin_kernel,
        out_shape=(jax.ShapeDtypeStruct((N, C, HW), jnp.int8),
                   jax.ShapeDtypeStruct((N, C, HW), jnp.float32)),
        grid=(N, pl.cdiv(HW, TILE)),
        in_specs=[pl.BlockSpec((1, C, TILE), lambda n, t: (n, 0, t)),
                  pl.BlockSpec((1, 1, TILE), lambda n, t: (n, 0, t))],
        out_specs=(pl.BlockSpec((1, C, TILE), lambda n, t: (n, 0, t)),
                   pl.BlockSpec((1, C, TILE), lambda n, t: (n, 0, t))),
        compiler_params=pltpu.CompilerParams(
            dimension_semantics=("parallel", "parallel"),
            vmem_limit_bytes=int(min(2 * blk1 + (8 << 20), 48 << 20))),
    )(inp3, tgt3)

    # ---- glue: per-sample descending stable sort, co-sorting the int8 labels ----
    # TODO(synk): data-dependent sort stays in plain JAX (no Pallas TPU sort primitive).
    errors = err3.reshape(N, P)
    labels = mask3.reshape(N, P)
    neg_sorted, labels_sorted = jax.lax.sort((-errors, labels), dimension=1,
                                             num_keys=1, is_stable=True)
    errors_sorted = -neg_sorted

    # ---- layout for kernel 2: (N, Rtot, B), sorted flat axis row-major, tiled over rows ----
    B = _CUMSUM_BLK
    r_raw = -(-P // B)
    if r_raw <= _ROWS_PER_TILE:
        TR = -(-r_raw // 8) * 8                 # keep the sublane dim a multiple of 8
        Rtot, T = TR, 1
    else:
        TR = _ROWS_PER_TILE
        T = -(-r_raw // TR)
        Rtot = T * TR
    Ppad = Rtot * B
    if Ppad != P:   # pads: err=-1 (relu -> 0), lab=0 -> contribute exactly zero
        pad = Ppad - P
        errors_sorted = jnp.pad(errors_sorted, ((0, 0), (0, pad)), constant_values=-1.0)
        labels_sorted = jnp.pad(labels_sorted, ((0, 0), (0, pad)), constant_values=0)
    err_rs = errors_sorted.reshape(N, Rtot, B)
    lab_rs = labels_sorted.reshape(N, Rtot, B)

    # constant triangular matrices for the hierarchical cumsum
    tri = (jnp.arange(B)[:, None] <= jnp.arange(B)[None, :]).astype(jnp.bfloat16)       # (B,B) upper
    strict = (jnp.arange(TR)[:, None] > jnp.arange(TR)[None, :]).astype(jnp.bfloat16)   # (TR,TR) strict lower

    blk2 = TR * B * 5 + B * B * 2 + TR * TR * 2 + 8 * _LANE * 4
    vmem2 = int(min(max(2 * blk2 + 14 * TR * B * 4 + (4 << 20), 16 << 20), 48 << 20))

    # TODO(synk): like the PyTorch reference, assumes every target is a valid class id
    # (so sum(labels) == H*W per sample); no ignore-label handling.
    kernel2 = functools.partial(_lovasz_kernel, total=float(HW))
    per_sample = pl.pallas_call(
        kernel2,
        out_shape=jax.ShapeDtypeStruct((N, 8, _LANE), jnp.float32),
        grid=(N, T),
        in_specs=[pl.BlockSpec((1, TR, B), lambda n, t: (n, t, 0)),
                  pl.BlockSpec((1, TR, B), lambda n, t: (n, t, 0)),
                  pl.BlockSpec((B, B), lambda n, t: (0, 0)),
                  pl.BlockSpec((TR, TR), lambda n, t: (0, 0))],
        out_specs=pl.BlockSpec((1, 8, _LANE), lambda n, t: (n, 0, 0)),
        scratch_shapes=[pltpu.VMEM((1, 1), jnp.float32),    # running label-cumsum carry
                        pltpu.VMEM((1, 1), jnp.float32)],   # per-sample loss accumulator
        compiler_params=pltpu.CompilerParams(
            dimension_semantics=("parallel", "arbitrary"),
            vmem_limit_bytes=vmem2),
    )(err_rs, lab_rs, tri, strict)

    return jnp.sum(per_sample[:, 0, 0]) / N


def _reference(inputs, targets):
    # pure-JAX mirror of the PyTorch forward, for verification
    N, C, H, W = inputs.shape
    masks = jax.nn.one_hot(targets, C, axis=1, dtype=jnp.float32)  # (N,C,H,W)
    loss = 0.0
    for n in range(N):
        mask = masks[n].reshape(-1)
        inp = inputs[n].reshape(-1)
        errors = 1.0 - (mask * 2.0 - 1.0) * inp
        order = jnp.argsort(-errors)
        es = errors[order]
        ls = mask[order]
        s = ls.sum()
        inter = s - jnp.cumsum(ls)
        union = s + jnp.cumsum(1.0 - ls)
        iou = 1.0 - inter / union
        grad = jnp.concatenate([iou[:1], iou[1:] - iou[:-1]])
        loss = loss + jnp.dot(jax.nn.relu(es), grad)
    return loss / N


if __name__ == "__main__":
    key = jax.random.PRNGKey(0)
    k1, k2 = jax.random.split(key)
    N, C, H, W = 2, 4, 16, 16

    inputs = jax.random.normal(k1, (N, C, H, W), dtype=jnp.float32)
    targets = jax.random.randint(k2, (N, H, W), 0, C, dtype=jnp.int32)

    loss = jax.block_until_ready(lovasz_loss_2d(inputs, targets))
    ref = jax.block_until_ready(_reference(inputs, targets))
    assert jnp.allclose(loss, ref, rtol=1e-4, atol=1e-5), (float(loss), float(ref))

    print("KERNEL_OK")
</pallas_src>

<mosaic_0001>
module attributes {stable_mosaic.version = 11 : i64} {
  func.func @_margin_kernel(%arg0: i32, %arg1: i32, %arg2: memref<1x4x256xf32, #tpu.memory_space<vmem>>, %arg3: memref<1x1x256xi32, #tpu.memory_space<vmem>>, %arg4: memref<1x4x256xi8, #tpu.memory_space<vmem>>, %arg5: memref<1x4x256xf32, #tpu.memory_space<vmem>>) attributes {dimension_semantics = [#tpu.dimension_semantics<parallel>, #tpu.dimension_semantics<parallel>], iteration_bounds = array<i64: 2, 1>, scalar_prefetch = 0 : i64, scratch_operands = 0 : i64, tpu.core_type = #tpu.core_type<tc>, window_params = [{transform_indices = @transform_0, window_bounds = array<i64: 1, 4, 256>}, {transform_indices = @transform_1, window_bounds = array<i64: 1, 1, 256>}, {transform_indices = @transform_2, window_bounds = array<i64: 1, 4, 256>}, {transform_indices = @transform_3, window_bounds = array<i64: 1, 4, 256>}]} {
    %0 = tpu.iota {dimensions = array<i32: 1>} : vector<1x4x256xi32>
    %c0 = arith.constant 0 : index
    %c0_0 = arith.constant 0 : index
    %c0_1 = arith.constant 0 : index
    %1 = vector.load %arg3[%c0, %c0_0, %c0_1] : memref<1x1x256xi32, #tpu.memory_space<vmem>>, vector<1x1x256xi32>
    %2 = vector.broadcast %1 : vector<1x1x256xi32> to vector<1x4x256xi32>
    %3 = arith.cmpi eq, %2, %0 : vector<1x4x256xi32>
    %4 = arith.extui %3 : vector<1x4x256xi1> to vector<1x4x256xi32>
    %5 = arith.sitofp %4 : vector<1x4x256xi32> to vector<1x4x256xf32>
    %6 = arith.fptosi %5 : vector<1x4x256xf32> to vector<1x4x256xi8>
    %c0_2 = arith.constant 0 : index
    %c0_3 = arith.constant 0 : index
    %c0_4 = arith.constant 0 : index
    %7 = vector.load %arg4[%c0_2, %c0_3, %c0_4] : memref<1x4x256xi8, #tpu.memory_space<vmem>>, vector<1x4x256xi8>
    tpu.vector_store %arg4[%c0_2, %c0_3, %c0_4], %6 {strides = array<i32>} : memref<1x4x256xi8, #tpu.memory_space<vmem>>, vector<1x4x256xi8>,
    %cst = arith.constant 2.000000e+00 : f32
    %8 = vector.broadcast %cst : f32 to vector<1x4x256xf32>
    %9 = arith.mulf %5, %8 : vector<1x4x256xf32>
    %cst_5 = arith.constant 1.000000e+00 : f32
    %10 = vector.broadcast %cst_5 : f32 to vector<1x4x256xf32>
    %11 = arith.subf %9, %10 : vector<1x4x256xf32>
    %c0_6 = arith.constant 0 : index
    %c0_7 = arith.constant 0 : index
    %c0_8 = arith.constant 0 : index
    %12 = vector.load %arg2[%c0_6, %c0_7, %c0_8] : memref<1x4x256xf32, #tpu.memory_space<vmem>>, vector<1x4x256xf32>
    %13 = arith.mulf %11, %12 : vector<1x4x256xf32>
    %cst_9 = arith.constant 1.000000e+00 : f32
    %14 = vector.broadcast %cst_9 : f32 to vector<1x4x256xf32>
    %15 = arith.subf %14, %13 : vector<1x4x256xf32>
    %c0_10 = arith.constant 0 : index
    %c0_11 = arith.constant 0 : index
    %c0_12 = arith.constant 0 : index
    %16 = vector.load %arg5[%c0_10, %c0_11, %c0_12] : memref<1x4x256xf32, #tpu.memory_space<vmem>>, vector<1x4x256xf32>
    tpu.vector_store %arg5[%c0_10, %c0_11, %c0_12], %15 {strides = array<i32>} : memref<1x4x256xf32, #tpu.memory_space<vmem>>, vector<1x4x256xf32>,
    return
  }
  func.func @transform_0(%arg0: i32, %arg1: i32) -> (i32, i32, i32) {
    %c0_i32 = arith.constant 0 : i32
    %c0_i32_0 = arith.constant 0 : i32
    return %arg0, %c0_i32, %arg1 : i32, i32, i32
  }
  func.func @transform_1(%arg0: i32, %arg1: i32) -> (i32, i32, i32) {
    %c0_i32 = arith.constant 0 : i32
    %c0_i32_0 = arith.constant 0 : i32
    return %arg0, %c0_i32, %arg1 : i32, i32, i32
  }
  func.func @transform_2(%arg0: i32, %arg1: i32) -> (i32, i32, i32) {
    %c0_i32 = arith.constant 0 : i32
    %c0_i32_0 = arith.constant 0 : i32
    return %arg0, %c0_i32, %arg1 : i32, i32, i32
  }
  func.func @transform_3(%arg0: i32, %arg1: i32) -> (i32, i32, i32) {
    %c0_i32 = arith.constant 0 : i32
    %c0_i32_0 = arith.constant 0 : i32
    return %arg0, %c0_i32, %arg1 : i32, i32, i32
  }
}

</mosaic_0001>

<llo_original>
// kernel: tpu_custom_call.1
$region0: #{tpu_custom_call.1}
  #allocation0 [shape = 'u32[]', space=smem, size = 0x4, offset = 0x4, fixed_abs, tag = 'smem constant byte address 0x4 - core index']
  #allocation1 [shape = 'u32[144,128]{1,0:T(1,128)}', space=vmem, size = 0x12000, scoped, tag = 'internal scratch']
  %s0 = inlined_call_operand.hbm [shape: f32[2,4,256], index: 0, kind: input, shape index: {}]
  %s1 = inlined_call_operand.hbm [shape: s32[2,1,256], index: 1, kind: input, shape index: {}]
  %s2 = inlined_call_operand.hbm [shape: s8[2,4,256], index: 2, kind: output, shape index: {0}]
  %s3 = inlined_call_operand.hbm [shape: f32[2,4,256], index: 3, kind: output, shape index: {1}]
  %4 = xla_tuple %s2, %s3
  %s5 = sld [smem:[#allocation0]]
  $region57: #{tpu_custom_call.1} parent=0
    _
  %s7 = ssub.s32 1, %s5
  %s8 = scalar_select 0, %s7, %s5
  $region1: #{tpu_custom_call.1} parent=0
    #allocation2 [shape = 'u8[8192]{0}', space=vmem, size = 0x2000, scoped, tag = 'input window, operand 0']
    #allocation3 [shape = 's32[2]{0}', space=sflag, size = 0x8, scoped, tag = 'scoped memory for tpu_custom_call.1']
    #allocation4 [shape = 's32[2]{0}', space=sflag, size = 0x8, scoped, tag = 'scoped memory for tpu_custom_call.1']
    #allocation5 [shape = 'u8[2048]{0}', space=vmem, size = 0x800, scoped, tag = 'input window, operand 1']
    #allocation6 [shape = 's32[2]{0}', space=sflag, size = 0x8, scoped, tag = 'scoped memory for tpu_custom_call.1']
    #allocation7 [shape = 'u8[2048]{0}', space=vmem, size = 0x800, scoped, tag = 'output window, operand 0']
    #allocation8 [shape = 'u8[8192]{0}', space=vmem, size = 0x2000, scoped, tag = 'output window, operand 1']
    #allocation9 [shape = 's32[2]{0}', space=sflag, size = 0x8, scoped, tag = 'scoped memory for tpu_custom_call.1']
    %9 = vsyncpa [#allocation3], 0
    %s10 = scalar_lea.sflag [#allocation3], 1
    %11 = vsyncpa %s10, 0
    %12 = vsyncpa [#allocation6], 0
    %s13 = scalar_lea.sflag [#allocation6], 1
    %14 = vsyncpa %s13, 0
    %15 = vsyncpa [#allocation4], 0
    %s16 = scalar_lea.sflag [#allocation4], 1
    %17 = vsyncpa %s16, 0
    %18 = vsyncpa [#allocation9], 0
    %s19 = scalar_lea.sflag [#allocation9], 1
    %20 = vsyncpa %s19, 0
    loop: start=0, step=1, limit=4
    $region2: #{tpu_custom_call.1} parent=1 // loop_pre_header
      _
    $region3: #{tpu_custom_call.1} parent=1 // loop_header
      %s22 = sphi 0, %s26
      %p23 = scmp.ge.s32.totalorder %s22, 4
      %s29 = sphi 0, %s41
      %s30 = sphi 0, %s37
      %s31 = sphi 0, %s29
      %s32 = sphi 0, %s30
      %s33 = sphi 0, %s31
      %s34 = sphi 0, %s32
      %s46 = sphi 0, %s48
      %s49 = sphi 0, %s46
      %s50 = sphi 0, %s49
      %s66 = sphi 0, %s50
      %s74 = sphi 0, %s76
      %s77 = sphi 0, %s74
      %s78 = sphi 0, %s77
      %s94 = sphi 0, %s78
      %s102 = sphi 0, %s104
      %s105 = sphi 0, %s102
      %s106 = sphi 0, %s105
      %s122 = sphi 0, %s106
      %s130 = sphi 0, %s132
      %s133 = sphi 0, %s130
      %s134 = sphi 0, %s133
      %s150 = sphi 0, %s134
    $region4: #{tpu_custom_call.1} parent=1 // loop_header_branch
      %25 = sbr.rel (%p23) target = $region8
    $region5: #{tpu_custom_call.1} parent=1 // loop_body
      %s27 = ssub.s32 %s22, 1
      %s28 = ssub.s32 %s22, 2
      %s35 = sadd.s32 1, %s30
      %p36 = scmp.ge.s32.totalorder %s35, 1
      %s37 = scalar_select %p36, 0, %s35
      %s38 = sadd.s32 1, %s29
      %s39 = scalar_select %p36, %s38, %s29
      %p40 = scmp.ge.s32.totalorder %s39, 2
      %s41 = scalar_select %p40, 0, %s39
      %s42 = ssub.s32 %s29, %s41
      %s43 = ssub.s32 %s30, %s37
      %s44 = sor.u32 %s42, %s43
      %p45 = scmp.eq.s32.totalorder %s44, 0
      %s47 = sadd.s32 %s46, 1
      %s48 = scalar_select %p45, %s46, %s47
      %p51 = pneg %p45
      %p52 = scmp.eq.s32.totalorder %s22, 1
      %p53 = por %p51, %p52
      %p54 = scmp.ne.s32.totalorder %s46, %s49
      %p55 = scmp.eq.s32.totalorder %s22, 0
      %p56 = por %p54, %p55
      %p57 = scmp.ne.s32.totalorder %s46, %s49
      %p58 = scmp.eq.s32.totalorder %s27, 1
      %p59 = por %p57, %p58
      %p60 = scmp.ne.s32.totalorder %s49, %s50
      %p61 = scmp.eq.s32.totalorder %s27, 0
      %p62 = por %p60, %p61
      %p63 = scmp.ne.s32.totalorder %s49, %s50
      %p64 = scmp.eq.s32.totalorder %s28, 1
      %p65 = por %p63, %p64
      %p67 = scmp.ne.s32.totalorder %s50, %s66
      %p68 = scmp.eq.s32.totalorder %s28, 0
      %p69 = por %p67, %p68
      %s70 = ssub.s32 %s29, %s41
      %s71 = ssub.s32 %s30, %s37
      %s72 = sor.u32 %s70, %s71
      %p73 = scmp.eq.s32.totalorder %s72, 0
      %s75 = sadd.s32 %s74, 1
      %s76 = scalar_select %p73, %s74, %s75
      %p79 = pneg %p73
      %p80 = scmp.eq.s32.totalorder %s22, 1
      %p81 = por %p79, %p80
      %p82 = scmp.ne.s32.totalorder %s74, %s77
      %p83 = scmp.eq.s32.totalorder %s22, 0
      %p84 = por %p82, %p83
      %p85 = scmp.ne.s32.totalorder %s74, %s77
      %p86 = scmp.eq.s32.totalorder %s27, 1
      %p87 = por %p85, %p86
      %p88 = scmp.ne.s32.totalorder %s77, %s78
      %p89 = scmp.eq.s32.totalorder %s27, 0
      %p90 = por %p88, %p89
      %p91 = scmp.ne.s32.totalorder %s77, %s78
      %p92 = scmp.eq.s32.totalorder %s28, 1
      %p93 = por %p91, %p92
      %p95 = scmp.ne.s32.totalorder %s78, %s94
      %p96 = scmp.eq.s32.totalorder %s28, 0
      %p97 = por %p95, %p96
      %s98 = ssub.s32 %s29, %s41
      %s99 = ssub.s32 %s30, %s37
      %s100 = sor.u32 %s98, %s99
      %p101 = scmp.eq.s32.totalorder %s100, 0
      %s103 = sadd.s32 %s102, 1
      %s104 = scalar_select %p101, %s102, %s103
      %p107 = pneg %p101
      %p108 = scmp.eq.s32.totalorder %s22, 1
      %p109 = por %p107, %p108
      %p110 = scmp.ne.s32.totalorder %s102, %s105
      %p111 = scmp.eq.s32.totalorder %s22, 0
      %p112 = por %p110, %p111
      %p113 = scmp.ne.s32.totalorder %s102, %s105
      %p114 = scmp.eq.s32.totalorder %s27, 1
      %p115 = por %p113, %p114
      %p116 = scmp.ne.s32.totalorder %s105, %s106
      %p117 = scmp.eq.s32.totalorder %s27, 0
      %p118 = por %p116, %p117
      %p119 = scmp.ne.s32.totalorder %s105, %s106
      %p120 = scmp.eq.s32.totalorder %s28, 1
      %p121 = por %p119, %p120
      %p123 = scmp.ne.s32.totalorder %s106, %s122
      %p124 = scmp.eq.s32.totalorder %s28, 0
      %p125 = por %p123, %p124
      %s126 = ssub.s32 %s29, %s41
      %s127 = ssub.s32 %s30, %s37
      %s128 = sor.u32 %s126, %s127
      %p129 = scmp.eq.s32.totalorder %s128, 0
      %s131 = sadd.s32 %s130, 1
      %s132 = scalar_select %p129, %s130, %s131
      %p135 = pneg %p129
      %p136 = scmp.eq.s32.totalorder %s22, 1
      %p137 = por %p135, %p136
      %p138 = scmp.ne.s32.totalorder %s130, %s133
      %p139 = scmp.eq.s32.totalorder %s22, 0
      %p140 = por %p138, %p139
      %p141 = scmp.ne.s32.totalorder %s130, %s133
      %p142 = scmp.eq.s32.totalorder %s27, 1
      %p143 = por %p141, %p142
      %p144 = scmp.ne.s32.totalorder %s133, %s134
      %p145 = scmp.eq.s32.totalorder %s27, 0
      %p146 = por %p144, %p145
      %p147 = scmp.ne.s32.totalorder %s133, %s134
      %p148 = scmp.eq.s32.totalorder %s28, 1
      %p149 = por %p147, %p148
      %p151 = scmp.ne.s32.totalorder %s134, %s150
      %p152 = scmp.eq.s32.totalorder %s28, 0
      %p153 = por %p151, %p152
      %p154 = scmp.le.s32.totalorder 1, %s22
      %p155 = scmp.lt.s32.totalorder %s22, 3
      %p156 = pnand %p154, %p155
      %p157 = pneg %p156
      // Predicated region
      $region9: #{tpu_custom_call.1} parent=5 // pred_check
        _
      $region10: #{tpu_custom_call.1} parent=5 // pred_check_branch
        %159 = sbr.rel (%p156) target = $region12
      $region11: #{tpu_custom_call.1} parent=5 // pred_region
        %s160 = ssub.s32 %s22, 1
      $region12: #{tpu_custom_call.1} parent=5 // pred_fallthru
        _
      %p161 = scmp.lt.s32.totalorder %s22, 2
      // Predicated region
      $region13: #{tpu_custom_call.1} parent=5 // pred_check
        %p162 = pneg %p161
      $region14: #{tpu_custom_call.1} parent=5 // pred_check_branch
        %164 = sbr.rel (%p162) target = $region16
      $region15: #{tpu_custom_call.1} parent=5 // pred_region
        // Predicated region
        $region17: #{tpu_custom_call.1} parent=15 // pred_check
          %p165 = pneg %p56
        $region18: #{tpu_custom_call.1} parent=15 // pred_check_branch
          %167 = sbr.rel (%p165) target = $region20
        $region19: #{tpu_custom_call.1} parent=15 // pred_region
          %s168 = sand.u32 %s46, 1
          %s169 = scalar_lea.sflag [#allocation3], %s168
          %s170 = sand.u32 %s46, 1
          %s171 = smul.addr %s170, 8
          %s172 = scalar_lea.vmem [#allocation2], %s171
          %s173 = smul.u32 2, %s30
          %s175 = ssub.s32 128, 128
          %176 = vsyncadd %s169, %s175
          %s177 = smul.addr %s29, 2
          %s178 = sadd.s32 %s173, %s177
          %s179 = smul.addr %s178, 64
          %s180 = scalar_lea.hbm %s0, %s179
          %s182 = sshll.u32 %s172, 4
          %s183 = int_to_ptr.vmem [resolvable:$true] %s182
          %185 = dma.hbm_to_vmem [thread:$0]  %s180, 128, %s183, %s169
        $region20: #{tpu_custom_call.1} parent=15 // pred_fallthru
          _
        // Predicated region
        $region21: #{tpu_custom_call.1} parent=15 // pred_check
          %p186 = pneg %p84
        $region22: #{tpu_custom_call.1} parent=15 // pred_check_branch
          %188 = sbr.rel (%p186) target = $region24
        $region23: #{tpu_custom_call.1} parent=15 // pred_region
          %s189 = sand.u32 %s74, 1
          %s190 = scalar_lea.sflag [#allocation6], %s189
          %s191 = sand.u32 %s74, 1
          %s192 = smul.addr %s191, 2
          %s193 = scalar_lea.vmem [#allocation5], %s192
          %s194 = smul.u32 2, %s30
          %s196 = ssub.s32 32, 32
          %197 = vsyncadd %s190, %s196
          %s198 = smul.addr %s29, 2
          %s199 = sadd.s32 %s194, %s198
          %s200 = smul.addr %s199, 16
          %s201 = scalar_lea.hbm %s1, %s200
          %s203 = sshll.u32 %s193, 4
          %s204 = int_to_ptr.vmem [resolvable:$true] %s203
          %206 = dma.hbm_to_vmem [thread:$0]  %s201, 32, %s204, %s190
        $region24: #{tpu_custom_call.1} parent=15 // pred_fallthru
          _
      $region16: #{tpu_custom_call.1} parent=5 // pred_fallthru
        _
      %p207 = scmp.le.s32.totalorder 1, %s22
      %p208 = scmp.lt.s32.totalorder %s22, 3
      %p209 = pnand %p207, %p208
      %p210 = pneg %p209
      // Predicated region
      $region25: #{tpu_custom_call.1} parent=5 // pred_check
        _
      $region26: #{tpu_custom_call.1} parent=5 // pred_check_branch
        %212 = sbr.rel (%p209) target = $region28
      $region27: #{tpu_custom_call.1} parent=5 // pred_region
        %s213 = ssub.s32 %s22, 1
        %s214 = sand.u32 %s49, 1
        %s215 = scalar_lea.sflag [#allocation3], %s214
        %s216 = sand.u32 %s49, 1
        %s217 = smul.addr %s216, 8
        %s218 = scalar_lea.vmem [#allocation2], %s217
        // Predicated region
        $region29: #{tpu_custom_call.1} parent=27 // pred_check
          %p219 = pneg %p62
        $region30: #{tpu_custom_call.1} parent=27 // pred_check_branch
          %221 = sbr.rel (%p219) target = $region32
        $region31: #{tpu_custom_call.1} parent=27 // pred_region
          %222 = dma.done %s215, 128
        $region32: #{tpu_custom_call.1} parent=27 // pred_fallthru
          _
        %s223 = sand.u32 %s77, 1
        %s224 = scalar_lea.sflag [#allocation6], %s223
        %s225 = sand.u32 %s77, 1
        %s226 = smul.addr %s225, 2
        %s227 = scalar_lea.vmem [#allocation5], %s226
        // Predicated region
        $region33: #{tpu_custom_call.1} parent=27 // pred_check
          %p228 = pneg %p90
        $region34: #{tpu_custom_call.1} parent=27 // pred_check_branch
          %230 = sbr.rel (%p228) target = $region36
        $region35: #{tpu_custom_call.1} parent=27 // pred_region
          %231 = dma.done %s224, 32
        $region36: #{tpu_custom_call.1} parent=27 // pred_fallthru
          _
        %s232 = sand.u32 %s49, 1
        %s233 = scalar_lea.sflag [#allocation3], %s232
        %s234 = sand.u32 %s49, 1
        %s235 = smul.addr %s234, 8
        %s236 = scalar_lea.vmem [#allocation2], %s235
        %p237 = pneg %p62
        %p238 = pneg %p59
        %s239 = sand.u32 %s77, 1
        %s240 = scalar_lea.sflag [#allocation6], %s239
        %s241 = sand.u32 %s77, 1
        %s242 = smul.addr %s241, 2
        %s243 = scalar_lea.vmem [#allocation5], %s242
        %p244 = pneg %p90
        %p245 = pneg %p87
        %p246 = pneg %p118
        %p247 = pneg %p115
        %s248 = sand.u32 %s105, 1
        %s249 = scalar_lea.sflag [#allocation4], %s248
        %s250 = sand.u32 %s105, 1
        %s251 = smul.addr %s250, 2
        %s252 = scalar_lea.vmem [#allocation7], %s251
        %p253 = pneg %p146
        %p254 = pneg %p143
        %s255 = sand.u32 %s133, 1
        %s256 = scalar_lea.sflag [#allocation9], %s255
        %s257 = sand.u32 %s133, 1
        %s258 = smul.addr %s257, 8
        %s259 = scalar_lea.vmem [#allocation8], %s258
        %s260 = smul.u32 2, %s32
        %s261 = smul.u32 2, %s32
        %s262 = smul.u32 2, %s32
        %s263 = smul.u32 2, %s32
        %v264 = vlaneseq
        %v265 = vshrl.u32 %v264, 7
        %v266 = vld [vmem:[%s227] sm:$0x3]
        %v267 = vlaneseq
        %v268 = vshrl.u32 %v267, 7
        %v269 = vsub.s32 0, %v268
        %v270 = vrot.slane %v266, %v269
        %v271 = vlaneseq
        %v272 = vshrl.u32 %v271, 7
        %v273 = vsub.s32 1, %v272
        %v274 = vrot.slane %v266, %v273
        %vm275 = vcmp.eq.s32.totalorder %v270, %v265
        %vm276 = vcmp.eq.s32.totalorder %v274, %v265
        %v277 = vsel %vm275, 1, 0
        %v278 = vsel %vm276, 1, 0
        %v279 = vcvt.s32.f32 %v277
        %v280 = vcvt.s32.f32 %v278
        %v281 = vmax.f32 %v279, -128.0
        %v282 = vmax.f32 %v280, -128.0
        %v283 = vmin.f32 %v281, 127.0
        %v284 = vmin.f32 %v282, 127.0
        %v285 = vcvt.f32.s32.to.zero.pseudo %v283
        %v286 = vcvt.f32.s32.to.zero.pseudo %v284
        %v287 = vpack.c.b16 %v285, %v285
        %v288 = vpack.c.b8 %v287, %v287
        %v289 = vpack.c.b16 %v286, %v286
        %v290 = vpack.c.b8 %v289, %v289
        %v291 = vcombine.low %v288, %v290
        %v293 = vunpack.c.l.s4 1966171168
        %v294 = vunpack.c.0.s8 %v293
        %v295 = vlaneseq
        %v296 = vshrl.u32 %v295, 7
        %v297 = vsub.s32 %v294, %v296
        %v298 = vrot.slane %v291, %v297
        %v300 = vunpack.c.l.s4 1966171168
        %v301 = vunpack.c.0.s8 %v300
        %v302 = vlaneseq
        %v303 = vshrl.u32 %v302, 7
        %v304 = vsub.s32 %v301, %v303
        %v305 = vrot.slane %v298, %v304
        %306 = vst [vmem:[%s252] sm:$0x3] %v305
        %v307 = vmul.f32 %v279, 2.0
        %v308 = vmul.f32 %v280, 2.0
        %v309 = vsub.f32 %v307, 1.0
        %v310 = vsub.f32 %v308, 1.0
        %v311 = vld [vmem:[%s218] sm:$0xff]
        %v313 = vcombine.high %v311, %v311
        %v315 = vmul.f32 %v309, %v311
        %v316 = vmul.f32 %v310, %v313
        %v317 = vsub.f32 1.0, %v315
        %v318 = vsub.f32 1.0, %v316
        %v321 = vcombine.low %v317, %v318
        %323 = vst [vmem:[%s259] sm:$0xff] %v321
        %s324 = sand.u32 %s105, 1
        %s325 = scalar_lea.sflag [#allocation4], %s324
        %s326 = sand.u32 %s105, 1
        %s327 = smul.addr %s326, 2
        %s328 = scalar_lea.vmem [#allocation7], %s327
        %s329 = sand.u32 %s133, 1
        %s330 = scalar_lea.sflag [#allocation9], %s329
        %s331 = sand.u32 %s133, 1
        %s332 = smul.addr %s331, 8
        %s333 = scalar_lea.vmem [#allocation8], %s332
        // Predicated region
        $region37: #{tpu_custom_call.1} parent=27 // pred_check
          %p334 = pneg %p115
        $region38: #{tpu_custom_call.1} parent=27 // pred_check_branch
          %336 = sbr.rel (%p334) target = $region40
        $region39: #{tpu_custom_call.1} parent=27 // pred_region
          %s337 = smul.u32 2, %s32
          %s339 = ssub.s32 32, 32
          %340 = vsyncadd %s325, %s339
          %s341 = smul.addr %s31, 2
          %s342 = sadd.s32 %s337, %s341
          %s343 = smul.addr %s342, 16
          %s344 = scalar_lea.hbm %s2, %s343
          %s346 = sshll.u32 %s328, 4
          %s347 = int_to_ptr.vmem [resolvable:$true] %s346
          %349 = dma.vmem_to_hbm [thread:$0]  %s347, 32, %s344, %s325
        $region40: #{tpu_custom_call.1} parent=27 // pred_fallthru
          _
        // Predicated region
        $region41: #{tpu_custom_call.1} parent=27 // pred_check
          %p350 = pneg %p143
        $region42: #{tpu_custom_call.1} parent=27 // pred_check_branch
          %352 = sbr.rel (%p350) target = $region44
        $region43: #{tpu_custom_call.1} parent=27 // pred_region
          %s353 = smul.u32 2, %s32
          %s355 = ssub.s32 128, 128
          %356 = vsyncadd %s330, %s355
          %s357 = smul.addr %s31, 2
          %s358 = sadd.s32 %s353, %s357
          %s359 = smul.addr %s358, 64
          %s360 = scalar_lea.hbm %s3, %s359
          %s362 = sshll.u32 %s333, 4
          %s363 = int_to_ptr.vmem [resolvable:$true] %s362
          %365 = dma.vmem_to_hbm [thread:$0]  %s363, 128, %s360, %s330
        $region44: #{tpu_custom_call.1} parent=27 // pred_fallthru
          _
      $region28: #{tpu_custom_call.1} parent=5 // pred_fallthru
        _
      %p366 = scmp.le.s32.totalorder 2, %s22
      // Predicated region
      $region45: #{tpu_custom_call.1} parent=5 // pred_check
        %p367 = pneg %p366
      $region46: #{tpu_custom_call.1} parent=5 // pred_check_branch
        %369 = sbr.rel (%p367) target = $region48
      $region47: #{tpu_custom_call.1} parent=5 // pred_region
        %s370 = ssub.s32 %s22, 2
        // Predicated region
        $region49: #{tpu_custom_call.1} parent=47 // pred_check
          %p371 = pneg %p121
        $region50: #{tpu_custom_call.1} parent=47 // pred_check_branch
          %373 = sbr.rel (%p371) target = $region52
        $region51: #{tpu_custom_call.1} parent=47 // pred_region
          %s374 = sand.u32 %s106, 1
          %s375 = scalar_lea.sflag [#allocation4], %s374
          %s376 = sand.u32 %s106, 1
          %s377 = smul.addr %s376, 2
          %s378 = scalar_lea.vmem [#allocation7], %s377
          %379 = dma.done %s375, 32
        $region52: #{tpu_custom_call.1} parent=47 // pred_fallthru
          _
        // Predicated region
        $region53: #{tpu_custom_call.1} parent=47 // pred_check
          %p380 = pneg %p149
        $region54: #{tpu_custom_call.1} parent=47 // pred_check_branch
          %382 = sbr.rel (%p380) target = $region56
        $region55: #{tpu_custom_call.1} parent=47 // pred_region
          %s383 = sand.u32 %s134, 1
          %s384 = scalar_lea.sflag [#allocation9], %s383
          %s385 = sand.u32 %s134, 1
          %s386 = smul.addr %s385, 8
          %s387 = scalar_lea.vmem [#allocation8], %s386
          %388 = dma.done %s384, 128
        $region56: #{tpu_custom_call.1} parent=47 // pred_fallthru
          _
      $region48: #{tpu_custom_call.1} parent=5 // pred_fallthru
        _
    $region6: #{tpu_custom_call.1} parent=1 // loop_footer
      %s26 = sadd.s32 1, %s22
    $region7: #{tpu_custom_call.1} parent=1 // loop_footer_branch
      %21 = sbr.rel target = $region3
    $region8: #{tpu_custom_call.1} parent=1 // loop_exit
      _
    %389 = vsyncpa [#allocation3], 1
    %s390 = scalar_lea.sflag [#allocation3], 1
    %391 = vsyncpa %s390, 1
    %392 = vsyncpa [#allocation6], 1
    %s393 = scalar_lea.sflag [#allocation6], 1
    %394 = vsyncpa %s393, 1
    %395 = vsyncpa [#allocation4], 1
    %s396 = scalar_lea.sflag [#allocation4], 1
    %397 = vsyncpa %s396, 1
    %398 = vsyncpa [#allocation9], 1
    %s399 = scalar_lea.sflag [#allocation9], 1
    %400 = vsyncpa %s399, 1

</llo_original>
